<compile_context>
chip_gen: v7x
topology: tpu7x:2x2x1
jax: 0.10.0
libtpu: 0.0.40
codegen_flags: <defaults>
</compile_context>

<pallas_src>
import jax
import jax.numpy as jnp
import numpy as np
from jax.experimental import pallas as pl
from jax.experimental.pallas import tpu as pltpu

# ----------------------------- configuration ------------------------------
N, C_IN, H, W = 2, 4, 16, 16
C_OUT = 8
KH = KW = 3
STRIDE = 1
PADDING = 2
DILATION = 2
EPS = 1e-5
NEG_SLOPE = 0.1

H_OUT = (H + 2 * PADDING - DILATION * (KH - 1) - 1) // STRIDE + 1
W_OUT = (W + 2 * PADDING - DILATION * (KW - 1) - 1) // STRIDE + 1
HW = H * W
SH = 128  # zero border on the flattened spatial axis (lane-aligned)

# The flat lane-shift trick below assumes stride-1 "same" geometry.
assert STRIDE == 1 and H_OUT == H and W_OUT == W
assert SH >= PADDING * W + PADDING


# ------------------------------- kernel -----------------------------------
def dilconv_kernel(x_ref, w_ref, gb_ref, out_ref, wide_ref):
    # x_ref:    (N*C_IN, H*W)            flattened NCHW input, spatial on lanes
    # w_ref:    (N*C_OUT, KH*KW*N*C_IN)  fused depthwise*pointwise weight,
    #                                    block-diagonal over the batch dim
    # gb_ref:   (C_OUT, 2)               packed BN affine params [gamma | beta]
    # out_ref:  (N*C_OUT, H*W)           lane-dense output (== NCHW flattened)
    # wide_ref: (N*C_IN, H*W + 2*SH)     zero-bordered activation scratch

    x = x_ref[...]
    xl = jnp.where(x > 0, x, NEG_SLOPE * x)                 # LeakyReLU(0.1)

    # Zero-bordered flattened image: only the two SH-wide borders need zeroing;
    # the middle is overwritten by xl (all stores 128-lane aligned, disjoint).
    wide_ref[:, :SH] = jnp.zeros((N * C_IN, SH), jnp.float32)
    wide_ref[:, SH + HW:] = jnp.zeros((N * C_IN, SH), jnp.float32)
    wide_ref[:, SH:SH + HW] = xl

    # Horizontal-wrap masks, hoisted: dw ∈ {-DILATION, 0, +DILATION}.
    col = jax.lax.broadcasted_iota(jnp.int32, (N * C_IN, HW), 1) % W
    valid_m = col - DILATION >= 0     # for dw = -DILATION taps
    valid_p = col + DILATION < W      # for dw = +DILATION taps

    # Build the 9 shifted slabs as register values (each is one 8-row sublane
    # group); concatenate feeds the MXU directly -- no im2col VMEM scratch.
    slabs = []
    for kh in range(KH):
        for kw in range(KW):
            dh = kh * DILATION - PADDING
            dw = kw * DILATION - PADDING
            delta = dh * W + dw                              # lane shift for this tap
            slab = wide_ref[:, SH + delta:SH + delta + HW]
            if dw < 0:
                slab = jnp.where(valid_m, slab, 0.0)
            elif dw > 0:
                slab = jnp.where(valid_p, slab, 0.0)
            slabs.append(slab)
    cols = jnp.concatenate(slabs, axis=0)                    # (KH*KW*N*C_IN, HW)

    # Fused depthwise + pointwise convolution: one MXU matmul, f32 accumulate.
    y = jnp.dot(w_ref[...], cols, preferred_element_type=jnp.float32)

    # BatchNorm2d, training mode (biased stats over N,H,W), single pass:
    # var = E[y^2] - mean^2 so both lane reductions overlap the MXU result pop.
    ys = [y[n * C_OUT:(n + 1) * C_OUT, :] for n in range(N)]
    s1 = sum(jnp.sum(yn, axis=1, keepdims=True) for yn in ys)
    s2 = sum(jnp.sum(yn * yn, axis=1, keepdims=True) for yn in ys)
    cnt = float(N * HW)
    mean = s1 / cnt
    var = s2 / cnt - mean * mean
    inv = jax.lax.rsqrt(var + EPS)

    gamma = gb_ref[:, 0:1]
    beta = gb_ref[:, 1:2]
    scale = inv * gamma
    shift = beta - mean * scale
    for n in range(N):
        out_ref[n * C_OUT:(n + 1) * C_OUT, :] = (
            ys[n] * scale + shift
        ).astype(out_ref.dtype)


# ------------------------------- wrapper -----------------------------------
def prepare_params(dw_w, pw_w, gamma, beta):
    """One-time weight prep (hoisted out of the per-call path).

    Folds the depthwise taps into the pointwise matmul and makes the combined
    weight block-diagonal over the batch so a single dot yields (N*C_OUT, H*W).
    Also packs gamma/beta into a single (C_OUT, 2) array (one DMA).
    """
    dw_k = jnp.transpose(dw_w[:, 0, :, :], (1, 2, 0)).reshape(KH * KW, C_IN)  # [tap, c]
    pw_mat = pw_w[:, :, 0, 0]                                                 # [o, c]
    w_comb = pw_mat[:, None, :] * dw_k[None, :, :]                            # [o, tap, c]
    eye_n = jnp.eye(N, dtype=jnp.float32)
    w_big = jnp.einsum("otc,nm->notmc", w_comb, eye_n).reshape(
        N * C_OUT, KH * KW * N * C_IN).astype(jnp.float32)
    gb = jnp.stack([gamma, beta], axis=1).astype(jnp.float32)                 # [C_OUT, 2]
    return w_big, gb


@jax.jit
def dilconv(x_nchw, w_big, gb):
    """x_nchw: (N, C_IN, H, W). Returns (N, C_OUT, H_OUT, W_OUT)."""
    # Free flatten (no transpose): rows = (n, c_in), lanes = h*W + w.
    x2d = x_nchw.reshape(N * C_IN, HW).astype(jnp.float32)

    vmem = pl.BlockSpec(memory_space=pltpu.MemorySpace.VMEM)
    out2d = pl.pallas_call(
        dilconv_kernel,
        out_shape=jax.ShapeDtypeStruct((N * C_OUT, HW), jnp.float32),
        in_specs=[vmem, vmem, vmem],
        out_specs=vmem,
        scratch_shapes=[
            pltpu.VMEM((N * C_IN, HW + 2 * SH), jnp.float32),      # wide_ref
        ],
    )(x2d, w_big, gb)

    # Free reshape: rows already ordered (n, c_out) -> NCHW.
    return out2d.reshape(N, C_OUT, H_OUT, W_OUT)


# ------------------------------ reference ----------------------------------
def reference(x_nchw, dw_w, pw_w, gamma, beta):
    y = jnp.where(x_nchw > 0, x_nchw, NEG_SLOPE * x_nchw)
    y = jax.lax.conv_general_dilated(
        y, dw_w, window_strides=(STRIDE, STRIDE),
        padding=[(PADDING, PADDING), (PADDING, PADDING)],
        rhs_dilation=(DILATION, DILATION),
        dimension_numbers=("NCHW", "OIHW", "NCHW"),
        feature_group_count=C_IN)
    y = jax.lax.conv_general_dilated(
        y, pw_w, window_strides=(1, 1), padding="VALID",
        dimension_numbers=("NCHW", "OIHW", "NCHW"))
    mean = y.mean(axis=(0, 2, 3), keepdims=True)
    var = ((y - mean) ** 2).mean(axis=(0, 2, 3), keepdims=True)
    y = (y - mean) / jnp.sqrt(var + EPS)
    return y * gamma[None, :, None, None] + beta[None, :, None, None]


# -------------------------------- main --------------------------------------
if __name__ == "__main__":
    key = jax.random.PRNGKey(0)
    kx, kdw, kpw, kg, kb = jax.random.split(key, 5)

    x = jax.random.normal(kx, (N, C_IN, H, W), jnp.float32)
    # Synthetic parameters matching nn.Conv2d / nn.BatchNorm2d shapes.
    dw_w = 0.2 * jax.random.normal(kdw, (C_IN, 1, KH, KW), jnp.float32)    # depthwise
    pw_w = 0.2 * jax.random.normal(kpw, (C_OUT, C_IN, 1, 1), jnp.float32)  # pointwise
    gamma = 1.0 + 0.1 * jax.random.normal(kg, (C_OUT,), jnp.float32)       # BN affine
    beta = 0.1 * jax.random.normal(kb, (C_OUT,), jnp.float32)

    # One-time parameter prep (static for inference), outside the hot path.
    w_big, gb = prepare_params(dw_w, pw_w, gamma, beta)
    w_big, gb = jax.block_until_ready((w_big, gb))

    out = dilconv(x, w_big, gb)
    out = jax.block_until_ready(out)

    ref = jax.block_until_ready(reference(x, dw_w, pw_w, gamma, beta))
    assert out.shape == (N, C_OUT, H_OUT, W_OUT), out.shape
    np.testing.assert_allclose(np.asarray(out), np.asarray(ref), rtol=1e-4, atol=1e-4)

    print("KERNEL_OK")
</pallas_src>

<mosaic_0001>
module attributes {stable_mosaic.version = 11 : i64} {
  func.func @dilconv_kernel(%arg0: memref<8x256xf32, #tpu.memory_space<vmem>>, %arg1: memref<16x72xf32, #tpu.memory_space<vmem>>, %arg2: memref<8x2xf32, #tpu.memory_space<vmem>>, %arg3: memref<16x256xf32, #tpu.memory_space<vmem>>, %arg4: memref<8x512xf32, #tpu.memory_space<vmem>>) attributes {dimension_semantics = [], scalar_prefetch = 0 : i64, scratch_operands = 1 : i64, tpu.core_type = #tpu.core_type<tc>} {
    %c0 = arith.constant 0 : index
    %c0_0 = arith.constant 0 : index
    %0 = vector.load %arg0[%c0, %c0_0] : memref<8x256xf32, #tpu.memory_space<vmem>>, vector<8x256xf32>
    %cst = arith.constant 0.000000e+00 : f32
    %1 = vector.broadcast %cst : f32 to vector<8x256xf32>
    %2 = arith.cmpf ogt, %0, %1 : vector<8x256xf32>
    %cst_1 = arith.constant 1.000000e-01 : f32
    %3 = vector.broadcast %cst_1 : f32 to vector<8x256xf32>
    %4 = arith.mulf %3, %0 : vector<8x256xf32>
    %5 = arith.select %2, %0, %4 : vector<8x256xi1>, vector<8x256xf32>
    %cst_2 = arith.constant 0.000000e+00 : f32
    %6 = vector.broadcast %cst_2 : f32 to vector<8x128xf32>
    %c0_3 = arith.constant 0 : index
    %c0_4 = arith.constant 0 : index
    %7 = vector.load %arg4[%c0_3, %c0_4] : memref<8x512xf32, #tpu.memory_space<vmem>>, vector<8x128xf32>
    tpu.vector_store %arg4[%c0_3, %c0_4], %6 {strides = array<i32>} : memref<8x512xf32, #tpu.memory_space<vmem>>, vector<8x128xf32>,
    %cst_5 = arith.constant 0.000000e+00 : f32
    %8 = vector.broadcast %cst_5 : f32 to vector<8x128xf32>
    %c0_6 = arith.constant 0 : index
    %c384 = arith.constant 384 : index
    %9 = vector.load %arg4[%c0_6, %c384] : memref<8x512xf32, #tpu.memory_space<vmem>>, vector<8x128xf32>
    tpu.vector_store %arg4[%c0_6, %c384], %8 {strides = array<i32>} : memref<8x512xf32, #tpu.memory_space<vmem>>, vector<8x128xf32>,
    %c0_7 = arith.constant 0 : index
    %c128 = arith.constant 128 : index
    %10 = vector.load %arg4[%c0_7, %c128] : memref<8x512xf32, #tpu.memory_space<vmem>>, vector<8x256xf32>
    tpu.vector_store %arg4[%c0_7, %c128], %5 {strides = array<i32>} : memref<8x512xf32, #tpu.memory_space<vmem>>, vector<8x256xf32>,
    %11 = tpu.iota {dimensions = array<i32: 1>} : vector<8x256xi32>
    %c16_i32 = arith.constant 16 : i32
    %c0_i32 = arith.constant 0 : i32
    %12 = arith.cmpi eq, %c16_i32, %c0_i32 : i32
    %c1_i32 = arith.constant 1 : i32
    %13 = arith.select %12, %c1_i32, %c16_i32 : i32
    %14 = vector.broadcast %13 : i32 to vector<8x256xi32>
    %15 = arith.remsi %11, %14 : vector<8x256xi32>
    %c0_i32_8 = arith.constant 0 : i32
    %16 = vector.broadcast %c0_i32_8 : i32 to vector<8x256xi32>
    %17 = arith.cmpi ne, %15, %16 : vector<8x256xi32>
    %c0_i32_9 = arith.constant 0 : i32
    %18 = vector.broadcast %c0_i32_9 : i32 to vector<8x256xi32>
    %19 = arith.cmpi slt, %15, %18 : vector<8x256xi32>
    %c0_i32_10 = arith.constant 0 : i32
    %20 = arith.cmpi slt, %13, %c0_i32_10 : i32
    %21 = vector.broadcast %20 : i1 to vector<8x256xi1>
    %22 = vector.broadcast %21 : vector<8x256xi1> to vector<8x256xi1>
    %23 = arith.xori %19, %22 : vector<8x256xi1>
    %24 = arith.andi %23, %17 : vector<8x256xi1>
    %25 = vector.broadcast %13 : i32 to vector<8x256xi32>
    %26 = arith.addi %15, %25 : vector<8x256xi32>
    %27 = arith.select %24, %26, %15 : vector<8x256xi1>, vector<8x256xi32>
    %c2_i32 = arith.constant 2 : i32
    %28 = vector.broadcast %c2_i32 : i32 to vector<8x256xi32>
    %29 = arith.subi %27, %28 : vector<8x256xi32>
    %c0_i32_11 = arith.constant 0 : i32
    %30 = vector.broadcast %c0_i32_11 : i32 to vector<8x256xi32>
    %31 = arith.cmpi sge, %29, %30 : vector<8x256xi32>
    %c2_i32_12 = arith.constant 2 : i32
    %32 = vector.broadcast %c2_i32_12 : i32 to vector<8x256xi32>
    %33 = arith.addi %27, %32 : vector<8x256xi32>
    %c16_i32_13 = arith.constant 16 : i32
    %34 = vector.broadcast %c16_i32_13 : i32 to vector<8x256xi32>
    %35 = arith.cmpi slt, %33, %34 : vector<8x256xi32>
    %c0_14 = arith.constant 0 : index
    %c94 = arith.constant 94 : index
    %36 = vector.load %arg4[%c0_14, %c94] : memref<8x512xf32, #tpu.memory_space<vmem>>, vector<8x256xf32>
    %cst_15 = arith.constant 0.000000e+00 : f32
    %37 = vector.broadcast %cst_15 : f32 to vector<8x256xf32>
    %38 = arith.select %31, %36, %37 : vector<8x256xi1>, vector<8x256xf32>
    %c0_16 = arith.constant 0 : index
    %c96 = arith.constant 96 : index
    %39 = vector.load %arg4[%c0_16, %c96] : memref<8x512xf32, #tpu.memory_space<vmem>>, vector<8x256xf32>
    %c0_17 = arith.constant 0 : index
    %c98 = arith.constant 98 : index
    %40 = vector.load %arg4[%c0_17, %c98] : memref<8x512xf32, #tpu.memory_space<vmem>>, vector<8x256xf32>
    %cst_18 = arith.constant 0.000000e+00 : f32
    %41 = vector.broadcast %cst_18 : f32 to vector<8x256xf32>
    %42 = arith.select %35, %40, %41 : vector<8x256xi1>, vector<8x256xf32>
    %c0_19 = arith.constant 0 : index
    %c126 = arith.constant 126 : index
    %43 = vector.load %arg4[%c0_19, %c126] : memref<8x512xf32, #tpu.memory_space<vmem>>, vector<8x256xf32>
    %cst_20 = arith.constant 0.000000e+00 : f32
    %44 = vector.broadcast %cst_20 : f32 to vector<8x256xf32>
    %45 = arith.select %31, %43, %44 : vector<8x256xi1>, vector<8x256xf32>
    %c0_21 = arith.constant 0 : index
    %c128_22 = arith.constant 128 : index
    %46 = vector.load %arg4[%c0_21, %c128_22] : memref<8x512xf32, #tpu.memory_space<vmem>>, vector<8x256xf32>
    %c0_23 = arith.constant 0 : index
    %c130 = arith.constant 130 : index
    %47 = vector.load %arg4[%c0_23, %c130] : memref<8x512xf32, #tpu.memory_space<vmem>>, vector<8x256xf32>
    %cst_24 = arith.constant 0.000000e+00 : f32
    %48 = vector.broadcast %cst_24 : f32 to vector<8x256xf32>
    %49 = arith.select %35, %47, %48 : vector<8x256xi1>, vector<8x256xf32>
    %c0_25 = arith.constant 0 : index
    %c158 = arith.constant 158 : index
    %50 = vector.load %arg4[%c0_25, %c158] : memref<8x512xf32, #tpu.memory_space<vmem>>, vector<8x256xf32>
    %cst_26 = arith.constant 0.000000e+00 : f32
    %51 = vector.broadcast %cst_26 : f32 to vector<8x256xf32>
    %52 = arith.select %31, %50, %51 : vector<8x256xi1>, vector<8x256xf32>
    %c0_27 = arith.constant 0 : index
    %c160 = arith.constant 160 : index
    %53 = vector.load %arg4[%c0_27, %c160] : memref<8x512xf32, #tpu.memory_space<vmem>>, vector<8x256xf32>
    %c0_28 = arith.constant 0 : index
    %c162 = arith.constant 162 : index
    %54 = vector.load %arg4[%c0_28, %c162] : memref<8x512xf32, #tpu.memory_space<vmem>>, vector<8x256xf32>
    %cst_29 = arith.constant 0.000000e+00 : f32
    %55 = vector.broadcast %cst_29 : f32 to vector<8x256xf32>
    %56 = arith.select %35, %54, %55 : vector<8x256xi1>, vector<8x256xf32>
    %57 = tpu.concatenate %38, %39, %42, %45, %46, %49, %52, %53, %56 in 0 : vector<8x256xf32>, vector<8x256xf32>, vector<8x256xf32>, vector<8x256xf32>, vector<8x256xf32>, vector<8x256xf32>, vector<8x256xf32>, vector<8x256xf32>, vector<8x256xf32> -> vector<72x256xf32>
    %c0_30 = arith.constant 0 : index
    %c0_31 = arith.constant 0 : index
    %58 = vector.load %arg1[%c0_30, %c0_31] : memref<16x72xf32, #tpu.memory_space<vmem>>, vector<16x72xf32>
    %cst_32 = arith.constant dense<0.000000e+00> : vector<16x256xf32>
    %59 = tpu.matmul %58, %57, %cst_32 {dimension_numbers = #tpu.dot_dimension_numbers<[1], [0], [0], [1], [0, 0, 1, 1], [], []>} : vector<16x72xf32>, vector<72x256xf32>, vector<16x256xf32> -> vector<16x256xf32>
    %60 = vector.extract_strided_slice %59 {offsets = [0, 0], sizes = [8, 256], strides = [1, 1]} : vector<16x256xf32> to vector<8x256xf32>
    %61 = vector.extract_strided_slice %59 {offsets = [8, 0], sizes = [8, 256], strides = [1, 1]} : vector<16x256xf32> to vector<8x256xf32>
    %cst_33 = arith.constant dense<0.000000e+00> : vector<8xf32>
    %62 = vector.multi_reduction <add>, %60, %cst_33 [1] : vector<8x256xf32> to vector<8xf32>
    %63 = vector.shape_cast %62 : vector<8xf32> to vector<8x1xf32>
    %cst_34 = arith.constant 0.000000e+00 : f32
    %64 = vector.broadcast %cst_34 : f32 to vector<8x1xf32>
    %65 = arith.addf %64, %63 : vector<8x1xf32>
    %cst_35 = arith.constant dense<0.000000e+00> : vector<8xf32>
    %66 = vector.multi_reduction <add>, %61, %cst_35 [1] : vector<8x256xf32> to vector<8xf32>
    %67 = vector.shape_cast %66 : vector<8xf32> to vector<8x1xf32>
    %68 = arith.addf %65, %67 : vector<8x1xf32>
    %69 = arith.mulf %60, %60 : vector<8x256xf32>
    %cst_36 = arith.constant dense<0.000000e+00> : vector<8xf32>
    %70 = vector.multi_reduction <add>, %69, %cst_36 [1] : vector<8x256xf32> to vector<8xf32>
    %71 = vector.shape_cast %70 : vector<8xf32> to vector<8x1xf32>
    %cst_37 = arith.constant 0.000000e+00 : f32
    %72 = vector.broadcast %cst_37 : f32 to vector<8x1xf32>
    %73 = arith.addf %72, %71 : vector<8x1xf32>
    %74 = arith.mulf %61, %61 : vector<8x256xf32>
    %cst_38 = arith.constant dense<0.000000e+00> : vector<8xf32>
    %75 = vector.multi_reduction <add>, %74, %cst_38 [1] : vector<8x256xf32> to vector<8xf32>
    %76 = vector.shape_cast %75 : vector<8xf32> to vector<8x1xf32>
    %77 = arith.addf %73, %76 : vector<8x1xf32>
    %cst_39 = arith.constant 5.120000e+02 : f32
    %78 = vector.broadcast %cst_39 : f32 to vector<8x1xf32>
    %79 = arith.divf %68, %78 : vector<8x1xf32>
    %cst_40 = arith.constant 5.120000e+02 : f32
    %80 = vector.broadcast %cst_40 : f32 to vector<8x1xf32>
    %81 = arith.divf %77, %80 : vector<8x1xf32>
    %82 = arith.mulf %79, %79 : vector<8x1xf32>
    %83 = arith.subf %81, %82 : vector<8x1xf32>
    %cst_41 = arith.constant 9.99999974E-6 : f32
    %84 = vector.broadcast %cst_41 : f32 to vector<8x1xf32>
    %85 = arith.addf %83, %84 : vector<8x1xf32>
    %86 = math.rsqrt %85 : vector<8x1xf32>
    %c0_42 = arith.constant 0 : index
    %c0_43 = arith.constant 0 : index
    %87 = vector.load %arg2[%c0_42, %c0_43] : memref<8x2xf32, #tpu.memory_space<vmem>>, vector<8x1xf32>
    %c0_44 = arith.constant 0 : index
    %c1 = arith.constant 1 : index
    %88 = vector.load %arg2[%c0_44, %c1] : memref<8x2xf32, #tpu.memory_space<vmem>>, vector<8x1xf32>
    %89 = arith.mulf %86, %87 : vector<8x1xf32>
    %90 = arith.mulf %79, %89 : vector<8x1xf32>
    %91 = arith.subf %88, %90 : vector<8x1xf32>
    %92 = vector.broadcast %89 : vector<8x1xf32> to vector<8x256xf32>
    %93 = arith.mulf %60, %92 : vector<8x256xf32>
    %94 = vector.broadcast %91 : vector<8x1xf32> to vector<8x256xf32>
    %95 = arith.addf %93, %94 : vector<8x256xf32>
    %c0_45 = arith.constant 0 : index
    %c0_46 = arith.constant 0 : index
    %96 = vector.load %arg3[%c0_45, %c0_46] : memref<16x256xf32, #tpu.memory_space<vmem>>, vector<8x256xf32>
    tpu.vector_store %arg3[%c0_45, %c0_46], %95 {strides = array<i32>} : memref<16x256xf32, #tpu.memory_space<vmem>>, vector<8x256xf32>,
    %97 = vector.broadcast %89 : vector<8x1xf32> to vector<8x256xf32>
    %98 = arith.mulf %61, %97 : vector<8x256xf32>
    %99 = vector.broadcast %91 : vector<8x1xf32> to vector<8x256xf32>
    %100 = arith.addf %98, %99 : vector<8x256xf32>
    %c8 = arith.constant 8 : index
    %c0_47 = arith.constant 0 : index
    %101 = vector.load %arg3[%c8, %c0_47] : memref<16x256xf32, #tpu.memory_space<vmem>>, vector<8x256xf32>
    tpu.vector_store %arg3[%c8, %c0_47], %100 {strides = array<i32>} : memref<16x256xf32, #tpu.memory_space<vmem>>, vector<8x256xf32>,
    return
  }
}

</mosaic_0001>

<llo_original>
// kernel: dilconv.1
$region0: #{dilconv.1}
  #allocation0 [shape = 'u32[]', space=smem, size = 0x4, offset = 0x4, fixed_abs, tag = 'smem constant byte address 0x4 - core index']
  #allocation1 [shape = 'u32[144,128]{1,0:T(1,128)}', space=vmem, size = 0x12000, scoped, tag = 'internal scratch']
  #allocation2 [shape = 'f32[8,512]{1,0:T(8,128)}', space=vmem, size = 0x4000, scoped, tag = 'scratch operand']
  %s0 = inlined_call_operand.vmem [shape: f32[8,256], index: 0, kind: input, shape index: {}]
  %s1 = inlined_call_operand.vmem [shape: f32[16,72], index: 1, kind: input, shape index: {}]
  %s2 = inlined_call_operand.vmem [shape: f32[8,2], index: 2, kind: input, shape index: {}]
  %s3 = inlined_call_operand.vmem [shape: f32[16,256], index: 3, kind: output, shape index: {}]
  %s4 = sld [smem:[#allocation0]]
  $region22: #{dilconv.1} parent=0
    _
  %s6 = ssub.s32 1, %s4
  %s7 = scalar_select 0, %s6, %s4
  // Predicated region
  $region2: #{dilconv.1} parent=0 // pred_check
    _
  $region3: #{dilconv.1} parent=0 // pred_check_branch
    %9 = sbr.rel (0) target = $region5
  $region4: #{dilconv.1} parent=0 // pred_region
    _
  $region5: #{dilconv.1} parent=0 // pred_fallthru
    _
  // Predicated region
  $region6: #{dilconv.1} parent=0 // pred_check
    _
  $region7: #{dilconv.1} parent=0 // pred_check_branch
    %11 = sbr.rel (0) target = $region9
  $region8: #{dilconv.1} parent=0 // pred_region
    _
  $region9: #{dilconv.1} parent=0 // pred_fallthru
    _
  // Predicated region
  $region10: #{dilconv.1} parent=0 // pred_check
    _
  $region11: #{dilconv.1} parent=0 // pred_check_branch
    %13 = sbr.rel (0) target = $region13
  $region12: #{dilconv.1} parent=0 // pred_region
    _
  $region13: #{dilconv.1} parent=0 // pred_fallthru
    _
  %v14 = vld [vmem:[%s0] sm:$0xff]
  %v15 = vld [vmem:[%s0 + $0x8] sm:$0xff]
  %vm16 = vcmp.gt.f32.partialorder %v14, 0.0
  %vm17 = vcmp.gt.f32.partialorder %v15, 0.0
  %v18 = vmul.f32 %v14, 0.1
  %v19 = vmul.f32 %v15, 0.1
  %v20 = vsel %vm16, %v14, %v18
  %v21 = vsel %vm17, %v15, %v19
  %22 = vst [vmem:[#allocation2] sm:$0xff] 0.0
  %23 = vst [vmem:[#allocation2 + $0x18] sm:$0xff] 0.0
  %24 = vst [vmem:[#allocation2 + $0x8] sm:$0xff] %v20
  %25 = vst [vmem:[#allocation2 + $0x10] sm:$0xff] %v21
  %v26 = vlaneseq
  %v27 = vand.u32 %v26, 127
  %v28 = vadd.s32 %v27, 128
  %vm29 = vcmp.lt.s32.totalorder %v27, 0
  %v30 = vsub.s32 0, %v27
  %v31 = vsel %vm29, %v30, %v27
  %v32 = vshrl.u32 %v31, 4
  %v33 = vand.u32 %v31, 15
  %v34 = vsub.s32 0, %v33
  %v35 = vsel %vm29, %v34, %v33
  %vm36 = vcmp.lt.s32.totalorder %v28, 0
  %v37 = vsub.s32 0, %v28
  %v38 = vsel %vm36, %v37, %v28
  %v39 = vshrl.u32 %v38, 4
  %v40 = vand.u32 %v38, 15
  %v41 = vsub.s32 0, %v40
  %v42 = vsel %vm36, %v41, %v40
  %vm43 = vcmp.ne.s32.totalorder %v35, 0
  %vm44 = vcmp.ne.s32.totalorder %v42, 0
  %vm45 = vcmp.lt.s32.totalorder %v35, 0
  %vm46 = vcmp.lt.s32.totalorder %v42, 0
  %vm47 = vmand %vm45, %vm43
  %vm48 = vmand %vm46, %vm44
  %v49 = vadd.s32 %v35, 16
  %v50 = vadd.s32 %v42, 16
  %v51 = vsel %vm47, %v49, %v35
  %v52 = vsel %vm48, %v50, %v42
  %v53 = vsub.s32 %v51, 2
  %v54 = vsub.s32 %v52, 2
  %vm55 = vcmp.ge.s32.totalorder %v53, 0
  %vm56 = vcmp.ge.s32.totalorder %v54, 0
  %v57 = vadd.s32 %v51, 2
  %v58 = vadd.s32 %v52, 2
  %vm59 = vcmp.lt.s32.totalorder %v57, 16
  %vm60 = vcmp.lt.s32.totalorder %v58, 16
  %v61 = vld [vmem:[#allocation2] sm:$0xff]
  %v62 = vld [vmem:[#allocation2 + $0x8] sm:$0xff]
  %v63 = vld [vmem:[#allocation2 + $0x10] sm:$0xff]
  %67 = vrot.lane.b32.xlu0 %v61, 34
  %v68 = vpop.permute.xlu0 %67
  %69 = vrot.lane.b32.xlu0 %v62, 34
  %v70 = vpop.permute.xlu0 %69
  %71 = vrot.lane.b32.xlu0 %v63, 34
  %v72 = vpop.permute.xlu0 %71
  %vm73 = vcmask 277504
  %v74 = vsel %vm73, %v68, %v70
  %v75 = vsel %vm73, %v70, %v72
  %v78 = vsel %vm55, %v74, 0.0
  %v79 = vsel %vm56, %v75, 0.0
  %80 = vrot.lane.b32.xlu0 %v61, 30
  %v81 = vpop.permute.xlu0 %80
  %82 = vrot.lane.b32.xlu0 %v62, 30
  %v83 = vpop.permute.xlu0 %82
  %84 = vrot.lane.b32.xlu0 %v63, 30
  %v85 = vpop.permute.xlu0 %84
  %vm86 = vcmask 244736
  %v87 = vsel %vm86, %v81, %v83
  %v88 = vsel %vm86, %v83, %v85
  %v91 = vsel %vm59, %v87, 0.0
  %v92 = vsel %vm60, %v88, 0.0
  %93 = vrot.lane.b32.xlu0 %v61, 2
  %v94 = vpop.permute.xlu0 %93
  %95 = vrot.lane.b32.xlu0 %v62, 2
  %v96 = vpop.permute.xlu0 %95
  %97 = vrot.lane.b32.xlu0 %v63, 2
  %v98 = vpop.permute.xlu0 %97
  %vm99 = vcmask 15360
  %v100 = vsel %vm99, %v94, %v96
  %v101 = vsel %vm99, %v96, %v98
  %v104 = vsel %vm55, %v100, 0.0
  %v105 = vsel %vm56, %v101, 0.0
  %v106 = vld [vmem:[#allocation2 + $0x8] sm:$0xff]
  %v107 = vld [vmem:[#allocation2 + $0x10] sm:$0xff]
  %v108 = vld [vmem:[#allocation2 + $0x18] sm:$0xff]
  %112 = vrot.lane.b32.xlu0 %v106, 126
  %v113 = vpop.permute.xlu0 %112
  %114 = vrot.lane.b32.xlu0 %v107, 126
  %v115 = vpop.permute.xlu0 %114
  %116 = vrot.lane.b32.xlu0 %v108, 126
  %v117 = vpop.permute.xlu0 %116
  %vm118 = vcmask 1031168
  %v119 = vsel %vm118, %v113, %v115
  %v120 = vsel %vm118, %v115, %v117
  %v123 = vsel %vm59, %v119, 0.0
  %v124 = vsel %vm60, %v120, 0.0
  %125 = vrot.lane.b32.xlu0 %v106, 98
  %v126 = vpop.permute.xlu0 %125
  %127 = vrot.lane.b32.xlu0 %v107, 98
  %v128 = vpop.permute.xlu0 %127
  %129 = vrot.lane.b32.xlu0 %v108, 98
  %v130 = vpop.permute.xlu0 %129
  %vm131 = vcmask 801792
  %v132 = vsel %vm131, %v126, %v128
  %v133 = vsel %vm131, %v128, %v130
  %v136 = vsel %vm55, %v132, 0.0
  %v137 = vsel %vm56, %v133, 0.0
  %138 = vrot.lane.b32.xlu0 %v106, 94
  %v139 = vpop.permute.xlu0 %138
  %140 = vrot.lane.b32.xlu0 %v107, 94
  %v141 = vpop.permute.xlu0 %140
  %142 = vrot.lane.b32.xlu0 %v108, 94
  %v143 = vpop.permute.xlu0 %142
  %vm144 = vcmask 769024
  %v145 = vsel %vm144, %v139, %v141
  %v146 = vsel %vm144, %v141, %v143
  %v149 = vsel %vm59, %v145, 0.0
  %v150 = vsel %vm60, %v146, 0.0
  %151 = vrot.lane.b32.xlu0 %v61, 32
  %v152 = vpop.permute.xlu0 %151
  %153 = vrot.lane.b32.xlu0 %v62, 32
  %v154 = vpop.permute.xlu0 %153
  %155 = vrot.lane.b32.xlu0 %v63, 32
  %v156 = vpop.permute.xlu0 %155
  %vm157 = vcmask 261120
  %v158 = vsel %vm157, %v152, %v154
  %v159 = vsel %vm157, %v154, %v156
  %162 = vrot.lane.b32.xlu0 %v106, 96
  %v163 = vpop.permute.xlu0 %162
  %164 = vrot.lane.b32.xlu0 %v107, 96
  %v165 = vpop.permute.xlu0 %164
  %166 = vrot.lane.b32.xlu0 %v108, 96
  %v167 = vpop.permute.xlu0 %166
  %vm168 = vcmask 785408
  %v169 = vsel %vm168, %v163, %v165
  %v170 = vsel %vm168, %v165, %v167
  %v173 = vld [vmem:[%s1] sm:$0xff]
  %v174 = vld [vmem:[%s1 + $0x8] sm:$0xff]
  %vm175 = vcmask 588800
  %v177 = vsel %vm175, %v173, 0
  %v180 = vsel %vm175, %v174, 0
  %182 = vmatprep.subr.mxu0 %v79
  %183 = vmatpush1.msra.mxu0 %v78
  %184 = vmatprep.subr.mxu0 %v159
  %185 = vmatpush1.msra.mxu0 %v158
  %186 = vmatprep.subr.mxu0 %v92
  %187 = vmatpush1.msra.mxu0 %v91
  %188 = vmatprep.subr.mxu0 %v105
  %189 = vmatpush1.msra.mxu0 %v104
  %190 = vmatprep.subr.mxu0 %v63
  %191 = vmatpush1.msra.mxu0 %v62
  %192 = vmatprep.subr.mxu0 %v124
  %193 = vmatpush1.msra.mxu0 %v123
  %194 = vmatprep.subr.mxu0 %v137
  %195 = vmatpush1.msra.mxu0 %v136
  %196 = vmatprep.subr.mxu0 %v170
  %197 = vmatpush1.msra.mxu0 %v169
  %198 = vmatprep.subr.mxu0 %v150
  %199 = vmatpush1.msra.mxu0 %v149
  %200 = vmatprep.subr.mxu0 0.0
  %201 = vmatpush1.msra.mxu0 0.0
  %202 = vmatprep.subr.mxu0 0.0
  %203 = vmatpush1.msra.mxu0 0.0
  %204 = vmatprep.subr.mxu0 0.0
  %205 = vmatpush1.msra.mxu0 0.0
  %206 = vmatprep.subr.mxu0 0.0
  %207 = vmatpush1.msra.mxu0 0.0
  %208 = vmatprep.subr.mxu0 0.0
  %209 = vmatpush1.msra.mxu0 0.0
  %210 = vmatprep.subr.mxu0 0.0
  %211 = vmatpush1.msra.mxu0 0.0
  %212 = vmatprep.subr.mxu0 0.0
  %213 = vmatpush1.msra.mxu0 0.0
  %214 = vmatprep.subr.mxu0 0.0
  %215 = vmatpush1.msra.mxu0 0.0
  %216 = vmatprep.subr.mxu0 0.0
  %217 = vmatpush1.msra.mxu0 0.0
  %218 = vmatprep.subr.mxu0 0.0
  %219 = vmatpush1.msra.mxu0 0.0
  %220 = vmatprep.subr.mxu0 0.0
  %221 = vmatpush1.msra.mxu0 0.0
  %222 = vmatprep.subr.mxu0 0.0
  %223 = vmatpush1.msra.mxu0 0.0
  %224 = vmatprep.subr.mxu0 0.0
  %225 = vmatpush1.msra.mxu0 0.0
  %226 = vmatprep.subr.mxu0 0.0
  %227 = vmatpush1.msra.mxu0 0.0
  %228 = vmatprep.subr.mxu0 0.0
  %229 = vmatpush1.msra.mxu0 0.0
  %230 = vmatprep.subr.mxu0 0.0
  %231 = vmatpush1.msra.mxu0 0.0
  %232 = vmatprep.subr.mxu0 0.0
  %233 = vmatpush1.msra.mxu0 0.0
  %234 = vmatprep.subr.mxu0 0.0
  %235 = vmatpush1.msra.mxu0 0.0
  %236 = vmatprep.subr.mxu0 0.0
  %237 = vmatpush1.msra.mxu0 0.0
  %238 = vmatprep.subr.mxu0 0.0
  %239 = vmatpush1.msra.mxu0 0.0
  %240 = vmatprep.subr.mxu0 0.0
  %241 = vmatpush1.msra.mxu0 0.0
  %242 = vmatprep.subr.mxu0 0.0
  %243 = vmatpush1.msra.mxu0 0.0
  %244 = vmatprep.subr.mxu0 0.0
  %245 = vmatpush1.msra.mxu0 0.0
  %246 = vmatprep.mubr.f32.mxu0 0.0
  %247 = vmatmul.mubr.f32.gmra.mrb[0].mxu0 %v177
  %v248 = vpop.f32.mrb[0].mxu0
  %v249 = vadd.f32 0.0, %v248
  %v250 = vpop.f32.mrb[0].mxu0
  %v251 = vadd.f32 0.0, %v250
  %252 = vmatprep.mubr.f32.mxu0 0.0
  %253 = vmatmul.mubr.f32.gmra.mrb[0].mxu0 %v180
  %v254 = vpop.f32.mrb[0].mxu0
  %v255 = vadd.f32 0.0, %v254
  %v256 = vpop.f32.mrb[0].mxu0
  %v257 = vadd.f32 0.0, %v256
  %258 = vdwg.mxu0
  %v259 = vadd.f32 %v249, %v251
  %260 = vadd.xlane.f32.xlu0 %v259
  %v261 = vpop.xlane.xlu0 %260
  %v262 = vadd.f32 %v261, 0.0
  %v263 = vadd.f32 %v255, %v257
  %264 = vadd.xlane.f32.xlu0 %v263
  %v265 = vpop.xlane.xlu0 %264
  %v266 = vadd.f32 %v262, %v265
  %v267 = vmul.f32 %v249, %v249
  %v268 = vmul.f32 %v251, %v251
  %v269 = vadd.f32 %v267, %v268
  %270 = vadd.xlane.f32.xlu0 %v269
  %v271 = vpop.xlane.xlu0 %270
  %v272 = vadd.f32 %v271, 0.0
  %v273 = vmul.f32 %v255, %v255
  %v274 = vmul.f32 %v257, %v257
  %v275 = vadd.f32 %v273, %v274
  %276 = vadd.xlane.f32.xlu0 %v275
  %v277 = vpop.xlane.xlu0 %276
  %v278 = vadd.f32 %v272, %v277
  %v279 = vrcp.pop 512.0
  %v280 = vmul.f32 %v266, %v279
  %v281 = vmul.f32 %v278, %v279
  %v282 = vmul.f32 %v280, %v280
  %v283 = vsub.f32 %v281, %v282
  %v284 = vadd.f32 %v283, 1e-05
  %v285 = vrsqrt.pop %v284
  %v286 = vld [vmem:[%s2] sm:$0xff]
  %v287 = vmul.f32 %v285, %v286
  %v288 = vmul.f32 %v280, %v287
  %290 = vrot.lane.b32.xlu0 %v288, 1
  %v291 = vpop.permute.xlu0 %290
  %v293 = vsub.f32 %v286, %v291
  %295 = vset.pattern.permute.xlu0 0
  %296 = vperm.xlu0 %295, %v287
  %v297 = vpop.permute.xlu0 %296
  %v299 = vmul.f32 %v249, %v297
  %v300 = vmul.f32 %v251, %v297
  %302 = vset.pattern.permute.xlu0 1
  %303 = vperm.xlu0 %302, %v293
  %v304 = vpop.permute.xlu0 %303
  %v306 = vadd.f32 %v299, %v304
  %v307 = vadd.f32 %v300, %v304
  %308 = vst [vmem:[%s3] sm:$0xff] %v306
  %309 = vst [vmem:[%s3 + $0x8] sm:$0xff] %v307
  %v310 = vmul.f32 %v255, %v297
  %v311 = vmul.f32 %v257, %v297
  %v312 = vadd.f32 %v310, %v304
  %v313 = vadd.f32 %v311, %v304
  %314 = vst [vmem:[%s3 + $0x10] sm:$0xff] %v312
  %315 = vst [vmem:[%s3 + $0x18] sm:$0xff] %v313
  // Predicated region
  $region14: #{dilconv.1} parent=0 // pred_check
    _
  $region15: #{dilconv.1} parent=0 // pred_check_branch
    %317 = sbr.rel (0) target = $region17
  $region16: #{dilconv.1} parent=0 // pred_region
    _
  $region17: #{dilconv.1} parent=0 // pred_fallthru
    _
  // Predicated region
  $region18: #{dilconv.1} parent=0 // pred_check
    _
  $region19: #{dilconv.1} parent=0 // pred_check_branch
    %319 = sbr.rel (0) target = $region21
  $region20: #{dilconv.1} parent=0 // pred_region
    _
  $region21: #{dilconv.1} parent=0 // pred_fallthru
    _

</llo_original>
